<compile_context>
chip_gen: v7x
topology: tpu7x:2x2x1
jax: 0.10.0
libtpu: 0.0.40
codegen_flags: <defaults>
</compile_context>

<pallas_src>
import functools
import math

import jax
import jax.numpy as jnp
from jax import lax
from jax.experimental import pallas as pl
from jax.experimental.pallas import tpu as pltpu

# MXU operand dtype (accumulation stays f32 via preferred_element_type).
MXU_DTYPE = jnp.bfloat16

HEADS, DIM_HEAD = 4, 32

# Sized so double-buffered tiles stay under v7x's 64 MiB physical VMEM
# (also above the 32 MiB scoped default on v6e).
VMEM_LIMIT_BYTES = 48 * 1024 * 1024


def _cparams(semantics):
    return pltpu.CompilerParams(dimension_semantics=semantics,
                                vmem_limit_bytes=VMEM_LIMIT_BYTES)


# ----------------------------- Pallas kernels ------------------------------

def _conv_taps(w, xb, K, Cin, Tout):
    """Conv1d as K accumulating MXU matmuls (no unfold temp). xb is bf16."""
    acc = jnp.dot(w[:, 0:Cin], xb[:, 0:Tout], preferred_element_type=jnp.float32)
    for k in range(1, K):
        acc += jnp.dot(w[:, k * Cin:(k + 1) * Cin], xb[:, k:k + Tout],
                       preferred_element_type=jnp.float32)
    return acc


def _conv_fused_kernel(*refs, K, Cin, Tout, has_mask_in, has_mask_out, has_add):
    """Conv1d (+bias) with optional fused input mask, output mask and add."""
    it = iter(refs)
    x_ref, w_ref, b_ref = next(it), next(it), next(it)
    mki_ref = next(it) if has_mask_in else None
    mko_ref = next(it) if has_mask_out else None
    add_ref = next(it) if has_add else None
    o_ref = next(it)

    x = x_ref[0]                                                # (Cin, Tin) f32
    if has_mask_in:
        x = x * mki_ref[0]
    h = _conv_taps(w_ref[...], x.astype(MXU_DTYPE), K, Cin, Tout) + b_ref[...]
    if has_mask_out:
        h = h * mko_ref[0]
    if has_add:
        h = h + add_ref[0]
    o_ref[0] = h.astype(o_ref.dtype)


def _block_fused_kernel(*refs, K, Cin, Tout, eps, denom, has_ss, res_mode):
    """Fused Block: WS-conv3 -> GroupNorm -> x*(scale+1)+shift -> SiLU -> *mask
    -> optional ResNet residual add (identity or fused 1x1 res_conv)."""
    it = iter(refs)
    x_ref, w_ref, b_ref = next(it), next(it), next(it)
    g_ref, bt_ref, mk_ref = next(it), next(it), next(it)
    mg_ref, me_ref = next(it), next(it)
    sc_ref = sh_ref = r_ref = rw_ref = rb_ref = None
    if has_ss:
        sc_ref, sh_ref = next(it), next(it)
    if res_mode != "none":
        r_ref = next(it)
        if res_mode == "conv":
            rw_ref, rb_ref = next(it), next(it)
    o_ref = next(it)

    xb = x_ref[0].astype(MXU_DTYPE)                             # (Cin, Tp)
    h = _conv_taps(w_ref[...], xb, K, Cin, Tout) + b_ref[...]   # (Cout, Tout) f32

    # GroupNorm stats: per-channel [sum, sum_sq] batched into one (C,2) operand,
    # group-reduced / re-expanded with tiny membership matmuls (one push each).
    s = jnp.concatenate([jnp.sum(h, axis=1, keepdims=True),
                         jnp.sum(h * h, axis=1, keepdims=True)], axis=1)   # (C,2)
    gs = jnp.dot(mg_ref[...], s, preferred_element_type=jnp.float32) / denom  # (G,2)
    gm = gs[:, 0:1]
    ginv = lax.rsqrt(gs[:, 1:2] - gm * gm + eps)                # (G,1), EUP
    cs = jnp.dot(me_ref[...], jnp.concatenate([gm, ginv], axis=1),
                 preferred_element_type=jnp.float32)            # (C,2)
    hn = (h - cs[:, 0:1]) * cs[:, 1:2] * g_ref[...] + bt_ref[...]
    if has_ss:
        hn = hn * (sc_ref[0] + 1.0) + sh_ref[0]
    hn = hn * jax.nn.sigmoid(hn)                                # SiLU
    hn = hn * mk_ref[0]
    if res_mode == "identity":
        hn = hn + r_ref[0]
    elif res_mode == "conv":
        hn = hn + (jnp.dot(rw_ref[...], r_ref[0].astype(MXU_DTYPE),
                           preferred_element_type=jnp.float32) + rb_ref[...])
    o_ref[0] = hn.astype(o_ref.dtype)


def _prenorm_qkv_kernel(x_ref, g_ref, b_ref, w_ref, o_ref, *, eps, denom):
    """Fused PreNorm (GroupNorm, 1 group) + 1x1 QKV projection (no bias)."""
    x = x_ref[0]                                                # (C, T) f32
    s1 = jnp.sum(x, axis=1, keepdims=True)
    s2 = jnp.sum(x * x, axis=1, keepdims=True)
    m = jnp.sum(s1, axis=0, keepdims=True) / denom              # (1, 1)
    v = jnp.sum(s2, axis=0, keepdims=True) / denom - m * m
    xn = (x - m) * lax.rsqrt(v + eps)
    xn = xn * g_ref[...] + b_ref[...]
    o_ref[0] = jnp.dot(w_ref[...], xn.astype(MXU_DTYPE),
                       preferred_element_type=jnp.float32).astype(o_ref.dtype)


def _linattn_kernel(qkv_ref, o_ref, *, heads, dim_head, scale):
    """Linear attention, all heads at once as two 128-wide MXU matmuls with a
    block-diagonal head mask (instead of per-head 32-wide pushes)."""
    HD = heads * dim_head
    qkv = qkv_ref[0]                                            # (3*HD, T) bf16
    q = qkv[0:HD, :].astype(jnp.float32)
    k = qkv[HD:2 * HD, :].astype(jnp.float32)
    v = qkv[2 * HD:3 * HD, :]
    # block-diagonal head membership (HD, HD)
    row_h = lax.broadcasted_iota(jnp.int32, (HD, HD), 0) // dim_head
    col_h = lax.broadcasted_iota(jnp.int32, (HD, HD), 1) // dim_head
    head_mask = (row_h == col_h).astype(jnp.float32)
    # q: softmax over the per-head feature dim (torch dim=-2).  Subtracting the
    # global column max (>= every per-head max) is mathematically identical;
    # the per-head denominator is one 128-wide membership matmul.
    q = jnp.exp(q - jnp.max(q, axis=0, keepdims=True))
    qden = jnp.dot(head_mask, q, preferred_element_type=jnp.float32)     # (HD, T)
    q = q * (pl.reciprocal(qden, approx=True) * scale)
    # k: softmax over the time dim (torch dim=-1)
    k = jnp.exp(k - jnp.max(k, axis=1, keepdims=True))
    k = k * pl.reciprocal(jnp.sum(k, axis=1, keepdims=True), approx=True)
    # ctx[d, e] = sum_n k[d, n] v[e, n]; cross-head blocks masked to zero.
    ctx = jnp.einsum('dn,en->de', k.astype(MXU_DTYPE), v.astype(MXU_DTYPE),
                     preferred_element_type=jnp.float32)        # (HD, HD)
    ctx = ctx * head_mask
    # out[e, n] = sum_d ctx[d, e] q[d, n]
    out = jnp.einsum('de,dn->en', ctx.astype(MXU_DTYPE), q.astype(MXU_DTYPE),
                     preferred_element_type=jnp.float32)        # (HD, T)
    o_ref[0] = out.astype(o_ref.dtype)


def _attn_out_kernel(a_ref, w_ref, b_ref, g_ref, bt_ref, r_ref, o_ref, *,
                     eps, denom):
    """Fused attention tail: 1x1 out conv + GroupNorm(1) + residual add
    (this is the `Residual` module: fn(x) + x)."""
    a = a_ref[0]                                                # (hidden, T)
    h = (jnp.dot(w_ref[...], a.astype(MXU_DTYPE),
                 preferred_element_type=jnp.float32) + b_ref[...])   # (C, T)
    s1 = jnp.sum(h, axis=1, keepdims=True)
    s2 = jnp.sum(h * h, axis=1, keepdims=True)
    m = jnp.sum(s1, axis=0, keepdims=True) / denom
    v = jnp.sum(s2, axis=0, keepdims=True) / denom - m * m
    hn = (h - m) * lax.rsqrt(v + eps)
    hn = hn * g_ref[...] + bt_ref[...]
    o_ref[0] = hn + r_ref[0]


def _linear_kernel(x_ref, w_ref, b_ref, o_ref, *, pre_silu):
    x = x_ref[...]
    if pre_silu:
        x = x * jax.nn.sigmoid(x)
    o_ref[...] = (jnp.dot(x.astype(MXU_DTYPE), w_ref[...],
                          preferred_element_type=jnp.float32) + b_ref[...])


# ------------------------- one-time parameter prep --------------------------

def standardize_weight(w, eps=1e-5):
    """WeightStandardizedConv1d: (w - mean) * rsqrt(var + eps); biased var over
    (kernel, in_channels) per output channel.  Run ONCE at prep time."""
    mean = jnp.mean(w, axis=(0, 2), keepdims=True)
    var = jnp.mean(jnp.square(w - mean), axis=(0, 2), keepdims=True)
    return (w - mean) * lax.rsqrt(var + eps)


def flatten_conv_weight(w):
    """(K, Cout, Cin) -> (Cout, K*Cin) in MXU dtype, matching tap order."""
    K, cout, cin = w.shape
    return jnp.transpose(w, (1, 0, 2)).reshape(cout, K * cin).astype(MXU_DTYPE)


def group_matrices(C, groups):
    gs = C // groups
    mg = jnp.kron(jnp.eye(groups, dtype=jnp.float32),
                  jnp.ones((1, gs), jnp.float32))               # (groups, C)
    return mg, mg.T                                             # and (C, groups)


def prep_conv(p, *, weight_standardize=False):
    w = standardize_weight(p['w']) if weight_standardize else p['w']
    K, cout, cin = w.shape
    return {'wf': flatten_conv_weight(w), 'b': p['b'],
            'K': K, 'cin': cin, 'cout': cout}


def prep_linear(p):
    return {'w': p['w'].astype(MXU_DTYPE), 'b': p['b']}


def prep_block(p, groups=8):
    cout = p['proj']['w'].shape[1]
    mg, me = group_matrices(cout, groups)
    return {'proj': prep_conv(p['proj'], weight_standardize=True),
            'gamma': p['gamma'], 'beta': p['beta'], 'mg': mg, 'me': me,
            'groups': groups}


def prep_resnet(p, groups=8):
    out = {'mlp': prep_linear(p['mlp']),
           'block1': prep_block(p['block1'], groups),
           'block2': prep_block(p['block2'], groups)}
    if 'res_conv' in p:
        out['res_conv'] = prep_conv(p['res_conv'])
    return out


def prep_attn(p):
    return {'prenorm': p['prenorm'],
            'to_qkv': {'w': p['to_qkv']['w'][0].astype(MXU_DTYPE)},
            'to_out_conv': {'w': p['to_out_conv']['w'][0].astype(MXU_DTYPE),
                            'b': p['to_out_conv']['b']},
            'to_out_gn': p['to_out_gn']}


def prepare_unet_params(params, groups=8):
    """Hoists all weight standardization / flattening / bf16 casts out of the
    per-forward glue (runs once)."""
    return {
        'init_conv': prep_conv(params['init_conv']),
        'time_mlp': {'lin1': prep_linear(params['time_mlp']['lin1']),
                     'lin2': prep_linear(params['time_mlp']['lin2'])},
        'downs': [{'cond': prep_conv(d['cond']),
                   'block1': prep_resnet(d['block1'], groups),
                   'block2': prep_resnet(d['block2'], groups),
                   'attn': prep_attn(d['attn']),
                   'down': prep_conv(d['down'])} for d in params['downs']],
        'mid_block1': prep_resnet(params['mid_block1'], groups),
        'mid_attn': prep_attn(params['mid_attn']),
        'mid_block2': prep_resnet(params['mid_block2'], groups),
        'ups': [{'block1': prep_resnet(u['block1'], groups),
                 'block2': prep_resnet(u['block2'], groups),
                 'attn': prep_attn(u['attn']),
                 'up': prep_conv(u['up'])} for u in params['ups']],
        'final_res': prep_resnet(params['final_res'], groups),
        'final_conv': prep_conv(params['final_conv']),
    }


# ----------------------------- Pallas wrappers ------------------------------

def pallas_conv1d(x, cp, *, stride=1, padding=0, mask_in=None, mask_out=None,
                  add=None, out_dtype=jnp.float32):
    """Conv1d with optional fused input-mask (x*mask before conv), output-mask
    and elementwise add (o = add + conv(..)*mask_out)."""
    wf, b, K, cin, cout = cp['wf'], cp['b'], cp['K'], cp['cin'], cp['cout']
    if stride > 1 and mask_in is not None:
        # strided conv gets unfolded in glue anyway; mask fuses into that pass.
        x = x * mask_in
        mask_in = None
    if padding:
        x = jnp.pad(x, ((0, 0), (0, 0), (padding, padding)))
        if mask_in is not None:
            mask_in = jnp.pad(mask_in, ((0, 0), (0, 0), (padding, padding)))
    B, _, Tp = x.shape
    Tout = (Tp - K) // stride + 1
    if stride == 1:
        xin, Ku = x, K
    else:
        # strided conv: gather exactly the needed columns per tap in glue so the
        # kernel does Tout columns of matmul work (no subsample-after).
        xin = jnp.concatenate(
            [x[:, :, k::stride][:, :, :Tout] for k in range(K)], axis=1)
        Ku = 1
    Cx, Tx = xin.shape[1], xin.shape[2]

    in_arrays = [xin, wf, b]
    in_specs = [pl.BlockSpec((1, Cx, Tx), lambda i: (i, 0, 0)),
                pl.BlockSpec((cout, K * cin), lambda i: (0, 0)),
                pl.BlockSpec((cout, 1), lambda i: (0, 0))]
    has_mask_in = mask_in is not None
    has_mask_out = mask_out is not None
    has_add = add is not None
    if has_mask_in:
        in_arrays.append(mask_in)
        in_specs.append(pl.BlockSpec((1, 1, Tx), lambda i: (i, 0, 0)))
    if has_mask_out:
        in_arrays.append(mask_out)
        in_specs.append(pl.BlockSpec((1, 1, Tout), lambda i: (i, 0, 0)))
    if has_add:
        cadd = add.shape[1]
        in_arrays.append(add)
        in_specs.append(pl.BlockSpec((1, cadd, Tout), lambda i: (i, 0, 0)))
    return pl.pallas_call(
        functools.partial(_conv_fused_kernel, K=Ku, Cin=Cx, Tout=Tout,
                          has_mask_in=has_mask_in, has_mask_out=has_mask_out,
                          has_add=has_add),
        out_shape=jax.ShapeDtypeStruct((B, cout, Tout), out_dtype),
        grid=(B,),
        in_specs=in_specs,
        out_specs=pl.BlockSpec((1, cout, Tout), lambda i: (i, 0, 0)),
        compiler_params=_cparams(("parallel",)),
    )(*in_arrays)


def pallas_block(x, mask, bp, scale_shift=None, eps=1e-5,
                 residual=None, res_conv=None):
    """Block.forward (WS-conv3(x*mask) -> GN -> scale/shift -> SiLU -> *mask),
    optionally fused with the ResNet residual add (identity or 1x1 res_conv)."""
    proj = bp['proj']
    wf, b = proj['wf'], proj['b']
    K, cin, cout = proj['K'], proj['cin'], proj['cout']
    groups = bp['groups']
    xm = jnp.pad(x * mask, ((0, 0), (0, 0), (1, 1)))            # padding=1
    B, _, Tp = xm.shape
    Tout = Tp - K + 1
    denom = float((cout // groups) * Tout)
    has_ss = scale_shift is not None
    if residual is None:
        res_mode = "none"
    elif res_conv is not None:
        res_mode = "conv"
    else:
        res_mode = "identity"

    in_arrays = [xm, wf, b, bp['gamma'], bp['beta'], mask, bp['mg'], bp['me']]
    in_specs = [
        pl.BlockSpec((1, cin, Tp), lambda i: (i, 0, 0)),
        pl.BlockSpec((cout, K * cin), lambda i: (0, 0)),
        pl.BlockSpec((cout, 1), lambda i: (0, 0)),
        pl.BlockSpec((cout, 1), lambda i: (0, 0)),     # gamma
        pl.BlockSpec((cout, 1), lambda i: (0, 0)),     # beta
        pl.BlockSpec((1, 1, Tout), lambda i: (i, 0, 0)),   # mask
        pl.BlockSpec((groups, cout), lambda i: (0, 0)),
        pl.BlockSpec((cout, groups), lambda i: (0, 0)),
    ]
    if has_ss:
        scale, shift = scale_shift
        in_arrays += [scale, shift]
        in_specs += [pl.BlockSpec((1, cout, 1), lambda i: (i, 0, 0)),
                     pl.BlockSpec((1, cout, 1), lambda i: (i, 0, 0))]
    if res_mode != "none":
        cres = residual.shape[1]
        in_arrays.append(residual)
        in_specs.append(pl.BlockSpec((1, cres, Tout), lambda i: (i, 0, 0)))
        if res_mode == "conv":
            in_arrays += [res_conv['wf'], res_conv['b']]
            in_specs += [pl.BlockSpec((cout, cres), lambda i: (0, 0)),
                         pl.BlockSpec((cout, 1), lambda i: (0, 0))]
    # TODO(synk): for production T, tile the time axis (lane-dense 128-multiple
    # blocks) and make the GroupNorm two-pass over partial s1/s2 sums.
    return pl.pallas_call(
        functools.partial(_block_fused_kernel, K=K, Cin=cin, Tout=Tout,
                          eps=eps, denom=denom, has_ss=has_ss,
                          res_mode=res_mode),
        out_shape=jax.ShapeDtypeStruct((B, cout, Tout), jnp.float32),
        grid=(B,),
        in_specs=in_specs,
        out_specs=pl.BlockSpec((1, cout, Tout), lambda i: (i, 0, 0)),
        compiler_params=_cparams(("parallel",)),
    )(*in_arrays)


def pallas_prenorm_qkv(x, gn_p, qkv_p, eps=1e-5):
    B, C, T = x.shape
    wf = qkv_p['w']                                             # (3*hidden, C) bf16
    cout = wf.shape[0]
    denom = float(C * T)
    return pl.pallas_call(
        functools.partial(_prenorm_qkv_kernel, eps=eps, denom=denom),
        out_shape=jax.ShapeDtypeStruct((B, cout, T), MXU_DTYPE),  # MXU-only consumer
        grid=(B,),
        in_specs=[
            pl.BlockSpec((1, C, T), lambda i: (i, 0, 0)),
            pl.BlockSpec((C, 1), lambda i: (0, 0)),
            pl.BlockSpec((C, 1), lambda i: (0, 0)),
            pl.BlockSpec((cout, C), lambda i: (0, 0)),
        ],
        out_specs=pl.BlockSpec((1, cout, T), lambda i: (i, 0, 0)),
        compiler_params=_cparams(("parallel",)),
    )(x, gn_p['gamma'], gn_p['beta'], wf)


def pallas_linear_attention(qkv, heads, dim_head, scale):
    B, C3, T = qkv.shape
    hidden = heads * dim_head
    return pl.pallas_call(
        functools.partial(_linattn_kernel, heads=heads, dim_head=dim_head,
                          scale=scale),
        out_shape=jax.ShapeDtypeStruct((B, hidden, T), MXU_DTYPE),
        grid=(B,),
        in_specs=[pl.BlockSpec((1, C3, T), lambda b: (b, 0, 0))],
        out_specs=pl.BlockSpec((1, hidden, T), lambda b: (b, 0, 0)),
        compiler_params=_cparams(("parallel",)),
    )(qkv)


def pallas_attn_out(a, out_p, gn_p, x_res, eps=1e-5):
    B, hidden, T = a.shape
    wf = out_p['w']                                             # (C, hidden) bf16
    C = wf.shape[0]
    denom = float(C * T)
    return pl.pallas_call(
        functools.partial(_attn_out_kernel, eps=eps, denom=denom),
        out_shape=jax.ShapeDtypeStruct((B, C, T), jnp.float32),
        grid=(B,),
        in_specs=[
            pl.BlockSpec((1, hidden, T), lambda i: (i, 0, 0)),
            pl.BlockSpec((C, hidden), lambda i: (0, 0)),
            pl.BlockSpec((C, 1), lambda i: (0, 0)),
            pl.BlockSpec((C, 1), lambda i: (0, 0)),
            pl.BlockSpec((C, 1), lambda i: (0, 0)),
            pl.BlockSpec((1, C, T), lambda i: (i, 0, 0)),
        ],
        out_specs=pl.BlockSpec((1, C, T), lambda i: (i, 0, 0)),
        compiler_params=_cparams(("parallel",)),
    )(a, wf, out_p['b'], gn_p['gamma'], gn_p['beta'], x_res)


def pallas_linear(x, params, *, pre_silu=False):
    w, b = params['w'], params['b']                             # bf16 w, f32 b
    B, Din = x.shape
    Dout = w.shape[1]
    return pl.pallas_call(
        functools.partial(_linear_kernel, pre_silu=pre_silu),
        out_shape=jax.ShapeDtypeStruct((B, Dout), jnp.float32),
        grid=(1,),
        in_specs=[
            pl.BlockSpec((B, Din), lambda i: (0, 0)),
            pl.BlockSpec((Din, Dout), lambda i: (0, 0)),
            pl.BlockSpec((1, Dout), lambda i: (0, 0)),
        ],
        out_specs=pl.BlockSpec((B, Dout), lambda i: (0, 0)),
        compiler_params=_cparams(("arbitrary",)),
    )(x, w, b)


# ----------------------------- module forwards ------------------------------

def resnet_block_forward(x, mask, t_emb, rp):
    ss = pallas_linear(t_emb, rp['mlp'], pre_silu=True)         # (B, 2*dim_out)
    dout = ss.shape[1] // 2
    scale = ss[:, :dout, None]
    shift = ss[:, dout:, None]
    h = pallas_block(x, mask, rp['block1'], (scale, shift))
    # block2 with the ResNet residual (identity or fused 1x1 res_conv) in-kernel
    return pallas_block(h, mask, rp['block2'], None,
                        residual=x, res_conv=rp.get('res_conv'))


def attn_block_forward(x, ap, heads=HEADS, dim_head=DIM_HEAD):
    """Residual(PreNorm(LinearAttention)) with fused pre/attn/post kernels; qkv
    stays one (B, 3*hidden, T) bf16 tensor (no glue split/reshape)."""
    qkv = pallas_prenorm_qkv(x, ap['prenorm'], ap['to_qkv'])
    out = pallas_linear_attention(qkv, heads, dim_head, dim_head ** -0.5)
    # to_out conv + GroupNorm + residual add (`Residual`) fused in one kernel.
    return pallas_attn_out(out, ap['to_out_conv'], ap['to_out_gn'], x)


def sinusoidal_pos_emb(time, dim, scale=1000):
    half = dim // 2
    e = math.log(10000.0) / (half - 1)
    e = jnp.exp(jnp.arange(half, dtype=jnp.float32) * -e)
    e = scale * time[:, None] * e[None, :]
    return jnp.concatenate([jnp.sin(e), jnp.cos(e)], axis=-1)


def time_mlp_forward(time, tp, dim, scale=1000):
    e = sinusoidal_pos_emb(time, dim, scale)
    h = pallas_linear(e, tp['lin1'])
    h = jax.nn.gelu(h, approximate=False)   # exact (erf) GELU, tiny -> glue
    return pallas_linear(h, tp['lin2'])


def unet1d_forward(params, x, time, cond, dim, dim_mults, scale=1000,
                   mask=None):
    n_down = 2 ** (len(dim_mults) - 1)
    B, _, T0 = x.shape
    if mask is None:
        mask = jnp.ones((B, 1, T0), jnp.float32)
    orig_t = T0
    pad_length = (-T0) % n_down
    if pad_length:
        x = jnp.pad(x, ((0, 0), (0, 0), (pad_length, 0)), mode='reflect')
        cond = jnp.pad(cond, ((0, 0), (0, 0), (pad_length, 0)), mode='reflect')
        mask = jnp.pad(mask, ((0, 0), (0, 0), (pad_length, 0)),
                       constant_values=1.0)

    x = pallas_conv1d(x, params['init_conv'])
    residual = x
    t_emb = time_mlp_forward(time, params['time_mlp'], dim, scale)

    h = []
    masks = [mask]
    n_levels = len(params['downs'])
    for ind, dp in enumerate(params['downs']):
        mask_down = masks[-1]
        # x = x + cond_conv(cond) * mask   (add + mask fused in the conv kernel)
        x = pallas_conv1d(cond, dp['cond'], stride=2 ** ind, padding=1,
                          mask_out=mask_down, add=x)
        x = resnet_block_forward(x, mask_down, t_emb, dp['block1'])
        h.append(x)
        x = resnet_block_forward(x, mask_down, t_emb, dp['block2'])
        x = attn_block_forward(x, dp['attn'])
        h.append(x)
        is_last = ind >= n_levels - 1
        # down conv of (x * mask); the mask multiply is fused (in-kernel for
        # stride 1, into the unfold gather for stride 2).
        x = pallas_conv1d(x, dp['down'], stride=1 if is_last else 2, padding=1,
                          mask_in=mask_down)
        masks.append(mask_down[:, :, ::2])

    masks = masks[:-1]
    mask_mid = masks[-1]
    x = resnet_block_forward(x, mask_mid, t_emb, params['mid_block1'])
    x = attn_block_forward(x, params['mid_attn'])
    x = resnet_block_forward(x, mask_mid, t_emb, params['mid_block2'])

    for ind, up in enumerate(params['ups']):
        mask_up = masks.pop()
        x = jnp.concatenate([x, h.pop()], axis=1)
        x = resnet_block_forward(x, mask_up, t_emb, up['block1'])
        x = jnp.concatenate([x, h.pop()], axis=1)
        x = resnet_block_forward(x, mask_up, t_emb, up['block2'])
        x = attn_block_forward(x, up['attn'])
        is_last = ind == len(params['ups']) - 1
        if not is_last:
            x = jnp.repeat(x, 2, axis=-1)   # nearest-neighbor upsample x2
        x = pallas_conv1d(x, up['up'], padding=1)

    x = jnp.concatenate([x, residual], axis=1)
    x = resnet_block_forward(x, mask, t_emb, params['final_res'])
    x = pallas_conv1d(x, params['final_conv'], mask_out=mask)   # fused *mask
    return x[:, :, -orig_t:]


# ----------------------------- parameter setup ------------------------------

class ParamGen:
    def __init__(self, seed):
        self.key = jax.random.PRNGKey(seed)

    def __call__(self, shape, scale=0.1):
        self.key, sub = jax.random.split(self.key)
        return jax.random.normal(sub, shape, jnp.float32) * scale


def make_conv_params(pg, cin, cout, k, bias=True):
    return {'w': pg((k, cout, cin)),
            'b': pg((cout, 1)) if bias else jnp.zeros((cout, 1), jnp.float32)}


def make_linear_params(pg, din, dout):
    return {'w': pg((din, dout)), 'b': pg((1, dout))}


def make_gn_params(c):
    return {'gamma': jnp.ones((c, 1), jnp.float32),
            'beta': jnp.zeros((c, 1), jnp.float32)}


def make_block_params(pg, cin, cout):
    p = make_gn_params(cout)
    p['proj'] = make_conv_params(pg, cin, cout, 3)
    return p


def make_resnet_params(pg, cin, cout, time_dim):
    p = {'mlp': make_linear_params(pg, time_dim, cout * 2),
         'block1': make_block_params(pg, cin, cout),
         'block2': make_block_params(pg, cout, cout)}
    if cin != cout:
        p['res_conv'] = make_conv_params(pg, cin, cout, 1)
    return p


def make_attn_params(pg, dim, heads=HEADS, dim_head=DIM_HEAD):
    hidden = heads * dim_head
    return {'prenorm': make_gn_params(dim),
            'to_qkv': make_conv_params(pg, dim, hidden * 3, 1, bias=False),
            'to_out_conv': make_conv_params(pg, hidden, dim, 1),
            'to_out_gn': make_gn_params(dim)}


def make_unet_params(pg, in_channels, encoder_channels, out_channels, dim,
                     dim_mults):
    dims = [dim] + [dim * m for m in dim_mults]
    in_out = list(zip(dims[:-1], dims[1:]))
    time_dim = dim * 4
    params = {
        'init_conv': make_conv_params(pg, in_channels, dim, 1),
        'time_mlp': {'lin1': make_linear_params(pg, dim, time_dim),
                     'lin2': make_linear_params(pg, time_dim, time_dim)},
        'downs': [], 'ups': [],
    }
    for ind, (din, dout) in enumerate(in_out):
        params['downs'].append({
            'cond': make_conv_params(pg, encoder_channels, din, 3),
            'block1': make_resnet_params(pg, din, din, time_dim),
            'block2': make_resnet_params(pg, din, din, time_dim),
            'attn': make_attn_params(pg, din),
            'down': make_conv_params(pg, din, dout, 3),
        })
    mid = dims[-1]
    params['mid_block1'] = make_resnet_params(pg, mid, mid, time_dim)
    params['mid_attn'] = make_attn_params(pg, mid)
    params['mid_block2'] = make_resnet_params(pg, mid, mid, time_dim)
    for ind, (din, dout) in enumerate(reversed(in_out)):
        params['ups'].append({
            'block1': make_resnet_params(pg, dout + din, dout, time_dim),
            'block2': make_resnet_params(pg, dout + din, dout, time_dim),
            'attn': make_attn_params(pg, dout),
            'up': make_conv_params(pg, dout, din, 3),
        })
    params['final_res'] = make_resnet_params(pg, dim * 2, dim, time_dim)
    params['final_conv'] = make_conv_params(pg, dim, out_channels, 1)
    return params


# ---------------------------------- main ------------------------------------

if __name__ == "__main__":
    in_channels = 4
    encoder_channels = 8
    out_channels = 4
    dim = 8
    dim_mults = (1, 2, 4)
    B, T = 2, 10   # T not a multiple of n_down=4 -> exercises reflect padding

    pg = ParamGen(1234)
    raw_params = make_unet_params(pg, in_channels, encoder_channels,
                                  out_channels, dim, dim_mults)
    # One-time prep: weight standardization, tap flattening, bf16 casts,
    # GroupNorm membership matrices.
    params = prepare_unet_params(raw_params, groups=8)

    key = jax.random.PRNGKey(0)
    kx, kt, kc = jax.random.split(key, 3)
    x = jax.random.normal(kx, (B, in_channels, T), jnp.float32)
    time = jax.random.uniform(kt, (B,), jnp.float32) * 100.0
    cond = jax.random.normal(kc, (B, encoder_channels, T), jnp.float32)

    out = unet1d_forward(params, x, time, cond, dim, dim_mults, scale=1000)
    out = jax.block_until_ready(out)
    assert out.shape == (B, out_channels, T), out.shape
    assert bool(jnp.all(jnp.isfinite(out)))
    print("KERNEL_OK")
</pallas_src>

<mosaic_0001>
module attributes {stable_mosaic.version = 11 : i64} {
  func.func @_conv_fused_kernel(%arg0: i32, %arg1: memref<1x4x12xf32, #tpu.memory_space<vmem>>, %arg2: memref<8x4xbf16, #tpu.memory_space<vmem>>, %arg3: memref<8x1xf32, #tpu.memory_space<vmem>>, %arg4: memref<1x8x12xf32, #tpu.memory_space<vmem>>) attributes {dimension_semantics = [#tpu.dimension_semantics<parallel>], iteration_bounds = array<i64: 2>, scalar_prefetch = 0 : i64, scratch_operands = 0 : i64, tpu.core_type = #tpu.core_type<tc>, window_params = [{transform_indices = @transform_0, window_bounds = array<i64: 1, 4, 12>}, {pipeline_mode = #tpu.pipeline_mode<synchronous>, transform_indices = @transform_1, window_bounds = array<i64: 8, 4>}, {pipeline_mode = #tpu.pipeline_mode<synchronous>, transform_indices = @transform_2, window_bounds = array<i64: 8, 1>}, {transform_indices = @transform_3, window_bounds = array<i64: 1, 8, 12>}]} {
    %c0 = arith.constant 0 : index
    %c0_0 = arith.constant 0 : index
    %c0_1 = arith.constant 0 : index
    %0 = vector.load %arg1[%c0, %c0_0, %c0_1] : memref<1x4x12xf32, #tpu.memory_space<vmem>>, vector<1x4x12xf32>
    %1 = vector.shape_cast %0 : vector<1x4x12xf32> to vector<4x12xf32>
    %c0_2 = arith.constant 0 : index
    %c0_3 = arith.constant 0 : index
    %2 = vector.load %arg2[%c0_2, %c0_3] : memref<8x4xbf16, #tpu.memory_space<vmem>>, vector<8x4xbf16>
    %3 = arith.truncf %1 : vector<4x12xf32> to vector<4x12xbf16>
    %cst = arith.constant dense<0.000000e+00> : vector<8x12xf32>
    %4 = tpu.matmul %2, %3, %cst {dimension_numbers = #tpu.dot_dimension_numbers<[1], [0], [0], [1], [0, 0, 1, 1], [], []>} : vector<8x4xbf16>, vector<4x12xbf16>, vector<8x12xf32> -> vector<8x12xf32>
    %c0_4 = arith.constant 0 : index
    %c0_5 = arith.constant 0 : index
    %5 = vector.load %arg3[%c0_4, %c0_5] : memref<8x1xf32, #tpu.memory_space<vmem>>, vector<8x1xf32>
    %6 = vector.broadcast %5 : vector<8x1xf32> to vector<8x12xf32>
    %7 = arith.addf %4, %6 : vector<8x12xf32>
    %c0_6 = arith.constant 0 : index
    %c0_7 = arith.constant 0 : index
    %c0_8 = arith.constant 0 : index
    %8 = vector.load %arg4[%c0_6, %c0_7, %c0_8] : memref<1x8x12xf32, #tpu.memory_space<vmem>>, vector<1x8x12xf32>
    %9 = vector.shape_cast %8 : vector<1x8x12xf32> to vector<8x12xf32>
    %10 = vector.shape_cast %7 : vector<8x12xf32> to vector<1x8x12xf32>
    tpu.vector_store %arg4[%c0_6, %c0_7, %c0_8], %10 {strides = array<i32>} : memref<1x8x12xf32, #tpu.memory_space<vmem>>, vector<1x8x12xf32>,
    return
  }
  func.func @transform_0(%arg0: i32) -> (i32, i32, i32) {
    %c0_i32 = arith.constant 0 : i32
    %c0_i32_0 = arith.constant 0 : i32
    %c0_i32_1 = arith.constant 0 : i32
    return %arg0, %c0_i32, %c0_i32_0 : i32, i32, i32
  }
  func.func @transform_1(%arg0: i32) -> (i32, i32) {
    %c0_i32 = arith.constant 0 : i32
    %c0_i32_0 = arith.constant 0 : i32
    %c0_i32_1 = arith.constant 0 : i32
    return %c0_i32, %c0_i32_0 : i32, i32
  }
  func.func @transform_2(%arg0: i32) -> (i32, i32) {
    %c0_i32 = arith.constant 0 : i32
    %c0_i32_0 = arith.constant 0 : i32
    %c0_i32_1 = arith.constant 0 : i32
    return %c0_i32, %c0_i32_0 : i32, i32
  }
  func.func @transform_3(%arg0: i32) -> (i32, i32, i32) {
    %c0_i32 = arith.constant 0 : i32
    %c0_i32_0 = arith.constant 0 : i32
    %c0_i32_1 = arith.constant 0 : i32
    return %arg0, %c0_i32, %c0_i32_0 : i32, i32, i32
  }
}

</mosaic_0001>

<llo_original>
// kernel: tpu_custom_call.1
$region0: #{tpu_custom_call.1}
  #allocation0 [shape = 'u32[]', space=smem, size = 0x4, offset = 0x4, fixed_abs, tag = 'smem constant byte address 0x4 - core index']
  #allocation1 [shape = 'u32[144,128]{1,0:T(1,128)}', space=vmem, size = 0x12000, scoped, tag = 'internal scratch']
  %s0 = inlined_call_operand.vmem [shape: f32[2,4,12], index: 0, kind: input, shape index: {}]
  %s1 = inlined_call_operand.vmem [shape: bf16[8,4], index: 1, kind: input, shape index: {}]
  %s2 = inlined_call_operand.vmem [shape: f32[8,1], index: 2, kind: input, shape index: {}]
  %s3 = inlined_call_operand.hbm [shape: f32[2,8,12], index: 3, kind: output, shape index: {}]
  %s4 = sld [smem:[#allocation0]]
  $region45: #{tpu_custom_call.1} parent=0
    _
  %s6 = ssub.s32 1, %s4
  %s7 = scalar_select 0, %s6, %s4
  $region1: #{tpu_custom_call.1} parent=0
    #allocation2 [shape = 'u8[8192]{0}', space=vmem, size = 0x2000, scoped, tag = 'output window, operand 0']
    #allocation3 [shape = 's32[2]{0}', space=sflag, size = 0x8, scoped, tag = 'scoped memory for tpu_custom_call.1']
    %8 = vsyncpa [#allocation3], 0
    %s9 = scalar_lea.sflag [#allocation3], 1
    %10 = vsyncpa %s9, 0
    loop: start=0, step=1, limit=4
    $region2: #{tpu_custom_call.1} parent=1 // loop_pre_header
      _
    $region3: #{tpu_custom_call.1} parent=1 // loop_header
      %s12 = sphi 0, %s16
      %p13 = scmp.ge.s32.totalorder %s12, 4
      %s22 = sphi 0, %s24
      %s25 = sphi 0, %s22
      %s26 = sphi 0, %s25
      %s42 = sphi 0, %s26
      %s46 = sphi 0, %s46
      %s48 = sphi 0, %s46
      %s49 = sphi 0, %s48
      %s63 = sphi 0, %s49
      %s67 = sphi 0, %s67
      %s69 = sphi 0, %s67
      %s70 = sphi 0, %s69
      %s84 = sphi 0, %s70
      %s90 = sphi 0, %s92
      %s93 = sphi 0, %s90
      %s94 = sphi 0, %s93
      %s110 = sphi 0, %s94
    $region4: #{tpu_custom_call.1} parent=1 // loop_header_branch
      %15 = sbr.rel (%p13) target = $region8
    $region5: #{tpu_custom_call.1} parent=1 // loop_body
      %s17 = ssub.s32 %s12, 1
      %s18 = ssub.s32 %s12, 2
      %s19 = sadd.s32 %s12, 1
      %s20 = ssub.s32 %s12, %s19
      %p21 = scmp.eq.s32.totalorder %s20, 0
      %s23 = sadd.s32 %s22, 1
      %s24 = scalar_select %p21, %s22, %s23
      %p27 = pneg %p21
      %p28 = scmp.eq.s32.totalorder %s12, 1
      %p29 = por %p27, %p28
      %p30 = scmp.ne.s32.totalorder %s22, %s25
      %p31 = scmp.eq.s32.totalorder %s12, 0
      %p32 = por %p30, %p31
      %p33 = scmp.ne.s32.totalorder %s22, %s25
      %p34 = scmp.eq.s32.totalorder %s17, 1
      %p35 = por %p33, %p34
      %p36 = scmp.ne.s32.totalorder %s25, %s26
      %p37 = scmp.eq.s32.totalorder %s17, 0
      %p38 = por %p36, %p37
      %p39 = scmp.ne.s32.totalorder %s25, %s26
      %p40 = scmp.eq.s32.totalorder %s18, 1
      %p41 = por %p39, %p40
      %p43 = scmp.ne.s32.totalorder %s26, %s42
      %p44 = scmp.eq.s32.totalorder %s18, 0
      %p45 = por %p43, %p44
      %s47 = sadd.s32 %s46, 1
      %p50 = scmp.eq.s32.totalorder %s12, 1
      %p51 = scmp.ne.s32.totalorder %s46, %s48
      %p52 = scmp.eq.s32.totalorder %s12, 0
      %p53 = por %p51, %p52
      %p54 = scmp.ne.s32.totalorder %s46, %s48
      %p55 = scmp.eq.s32.totalorder %s17, 1
      %p56 = por %p54, %p55
      %p57 = scmp.ne.s32.totalorder %s48, %s49
      %p58 = scmp.eq.s32.totalorder %s17, 0
      %p59 = por %p57, %p58
      %p60 = scmp.ne.s32.totalorder %s48, %s49
      %p61 = scmp.eq.s32.totalorder %s18, 1
      %p62 = por %p60, %p61
      %p64 = scmp.ne.s32.totalorder %s49, %s63
      %p65 = scmp.eq.s32.totalorder %s18, 0
      %p66 = por %p64, %p65
      %s68 = sadd.s32 %s67, 1
      %p71 = scmp.eq.s32.totalorder %s12, 1
      %p72 = scmp.ne.s32.totalorder %s67, %s69
      %p73 = scmp.eq.s32.totalorder %s12, 0
      %p74 = por %p72, %p73
      %p75 = scmp.ne.s32.totalorder %s67, %s69
      %p76 = scmp.eq.s32.totalorder %s17, 1
      %p77 = por %p75, %p76
      %p78 = scmp.ne.s32.totalorder %s69, %s70
      %p79 = scmp.eq.s32.totalorder %s17, 0
      %p80 = por %p78, %p79
      %p81 = scmp.ne.s32.totalorder %s69, %s70
      %p82 = scmp.eq.s32.totalorder %s18, 1
      %p83 = por %p81, %p82
      %p85 = scmp.ne.s32.totalorder %s70, %s84
      %p86 = scmp.eq.s32.totalorder %s18, 0
      %p87 = por %p85, %p86
      %s88 = ssub.s32 %s12, %s19
      %p89 = scmp.eq.s32.totalorder %s88, 0
      %s91 = sadd.s32 %s90, 1
      %s92 = scalar_select %p89, %s90, %s91
      %p95 = pneg %p89
      %p96 = scmp.eq.s32.totalorder %s12, 1
      %p97 = por %p95, %p96
      %p98 = scmp.ne.s32.totalorder %s90, %s93
      %p99 = scmp.eq.s32.totalorder %s12, 0
      %p100 = por %p98, %p99
      %p101 = scmp.ne.s32.totalorder %s90, %s93
      %p102 = scmp.eq.s32.totalorder %s17, 1
      %p103 = por %p101, %p102
      %p104 = scmp.ne.s32.totalorder %s93, %s94
      %p105 = scmp.eq.s32.totalorder %s17, 0
      %p106 = por %p104, %p105
      %p107 = scmp.ne.s32.totalorder %s93, %s94
      %p108 = scmp.eq.s32.totalorder %s18, 1
      %p109 = por %p107, %p108
      %p111 = scmp.ne.s32.totalorder %s94, %s110
      %p112 = scmp.eq.s32.totalorder %s18, 0
      %p113 = por %p111, %p112
      %p114 = scmp.le.s32.totalorder 1, %s12
      %p115 = scmp.lt.s32.totalorder %s12, 3
      %p116 = pnand %p114, %p115
      %p117 = pneg %p116
      // Predicated region
      $region9: #{tpu_custom_call.1} parent=5 // pred_check
        _
      $region10: #{tpu_custom_call.1} parent=5 // pred_check_branch
        %119 = sbr.rel (%p116) target = $region12
      $region11: #{tpu_custom_call.1} parent=5 // pred_region
        %s120 = ssub.s32 %s12, 1
        // Predicated region
        $region13: #{tpu_custom_call.1} parent=11 // pred_check
          %p121 = pneg %p59
        $region14: #{tpu_custom_call.1} parent=11 // pred_check_branch
          %123 = sbr.rel (%p121) target = $region16
        $region15: #{tpu_custom_call.1} parent=11 // pred_region
          _
        $region16: #{tpu_custom_call.1} parent=11 // pred_fallthru
          _
        // Predicated region
        $region17: #{tpu_custom_call.1} parent=11 // pred_check
          %p124 = pneg %p80
        $region18: #{tpu_custom_call.1} parent=11 // pred_check_branch
          %126 = sbr.rel (%p124) target = $region20
        $region19: #{tpu_custom_call.1} parent=11 // pred_region
          _
        $region20: #{tpu_custom_call.1} parent=11 // pred_fallthru
          _
      $region12: #{tpu_custom_call.1} parent=5 // pred_fallthru
        _
      %p127 = scmp.lt.s32.totalorder %s12, 2
      // Predicated region
      $region21: #{tpu_custom_call.1} parent=5 // pred_check
        %p128 = pneg %p127
      $region22: #{tpu_custom_call.1} parent=5 // pred_check_branch
        %130 = sbr.rel (%p128) target = $region24
      $region23: #{tpu_custom_call.1} parent=5 // pred_region
        // Predicated region
        $region25: #{tpu_custom_call.1} parent=23 // pred_check
          %p131 = pneg %p32
        $region26: #{tpu_custom_call.1} parent=23 // pred_check_branch
          %133 = sbr.rel (%p131) target = $region28
        $region27: #{tpu_custom_call.1} parent=23 // pred_region
          %p134 = scmp.lt.s32.totalorder %s12, 1
          %s135 = scalar_select %p134, %s12, 1
          %s136 = smul.addr %s135, 4
          %s137 = scalar_lea.vmem %s0, %s136
        $region28: #{tpu_custom_call.1} parent=23 // pred_fallthru
          _
      $region24: #{tpu_custom_call.1} parent=5 // pred_fallthru
        _
      %p138 = scmp.le.s32.totalorder 1, %s12
      %p139 = scmp.lt.s32.totalorder %s12, 3
      %p140 = pnand %p138, %p139
      %p141 = pneg %p140
      // Predicated region
      $region29: #{tpu_custom_call.1} parent=5 // pred_check
        _
      $region30: #{tpu_custom_call.1} parent=5 // pred_check_branch
        %143 = sbr.rel (%p140) target = $region32
      $region31: #{tpu_custom_call.1} parent=5 // pred_region
        %s144 = ssub.s32 %s12, 1
        %p145 = scmp.lt.s32.totalorder %s17, 1
        %s146 = scalar_select %p145, %s17, 1
        %s147 = smul.addr %s146, 4
        %s148 = scalar_lea.vmem %s0, %s147
        %p149 = pneg %p38
        %p150 = pneg %p35
        %p151 = pneg %p59
        %p152 = pneg %p56
        %p153 = pneg %p80
        %p154 = pneg %p77
        %p155 = pneg %p106
        %p156 = pneg %p103
        %s157 = sand.u32 %s93, 1
        %s158 = scalar_lea.sflag [#allocation3], %s157
        %s159 = sand.u32 %s93, 1
        %s160 = smul.addr %s159, 8
        %s161 = scalar_lea.vmem [#allocation2], %s160
        %p162 = scmp.lt.s32.totalorder %s17, 1
        %s163 = scalar_select %p162, %s17, 1
        %s164 = smul.addr %s163, 4
        %s165 = scalar_lea.vmem %s0, %s164
        %v167 = vld [vmem:[%s165] sm:$0xf]
        %v168 = vld [vmem:[%s1] sm:$0xf]
        %v169 = vpack.c.bf16 %v167, %v167
        %v170 = vld [vmem:[%s2] sm:$0xff]
        %172 = vset.pattern.permute.xlu0 0
        %173 = vperm.xlu0 %172, %v170
        %v174 = vpop.permute.xlu0 %173
        %vm176 = vcmask 31744
        %v178 = vsel %vm176, %v168, 0
        %vm180 = vcmask 1041408
        %v182 = vsel %vm180, %v169, 0
        %184 = vmatprep.subr.bf16.mxu0 0
        %185 = vmatpush1.bf16.msra.mxu0 %v182
        %186 = vmatprep.subr.bf16.mxu0 0
        %187 = vmatpush1.bf16.msra.mxu0 0
        %188 = vmatprep.subr.bf16.mxu0 0
        %189 = vmatpush1.bf16.msra.mxu0 0
        %190 = vmatprep.subr.bf16.mxu0 0
        %191 = vmatpush1.bf16.msra.mxu0 0
        %192 = vmatprep.subr.bf16.mxu0 0
        %193 = vmatpush1.bf16.msra.mxu0 0
        %194 = vmatprep.subr.bf16.mxu0 0
        %195 = vmatpush1.bf16.msra.mxu0 0
        %196 = vmatprep.subr.bf16.mxu0 0
        %197 = vmatpush1.bf16.msra.mxu0 0
        %198 = vmatprep.subr.bf16.mxu0 0
        %199 = vmatpush1.bf16.msra.mxu0 0
        %200 = vmatprep.subr.bf16.mxu0 0
        %201 = vmatpush1.bf16.msra.mxu0 0
        %202 = vmatprep.subr.bf16.mxu0 0
        %203 = vmatpush1.bf16.msra.mxu0 0
        %204 = vmatprep.subr.bf16.mxu0 0
        %205 = vmatpush1.bf16.msra.mxu0 0
        %206 = vmatprep.subr.bf16.mxu0 0
        %207 = vmatpush1.bf16.msra.mxu0 0
        %208 = vmatprep.subr.bf16.mxu0 0
        %209 = vmatpush1.bf16.msra.mxu0 0
        %210 = vmatprep.subr.bf16.mxu0 0
        %211 = vmatpush1.bf16.msra.mxu0 0
        %212 = vmatprep.subr.bf16.mxu0 0
        %213 = vmatpush1.bf16.msra.mxu0 0
        %214 = vmatprep.subr.bf16.mxu0 0
        %215 = vmatpush1.bf16.msra.mxu0 0
        %216 = vmatprep.mubr.bf16.mxu0 0
        %217 = vmatmul.mubr.bf16.gmra.mrb[0].mxu0 %v178
        %v218 = vpop.f32.mrb[0].mxu0
        %v219 = vadd.f32 %v174, %v218
        %v220 = vpop.f32.mrb[0].mxu0
        %v221 = vpop.f32.mrb[0].mxu0
        %v222 = vpop.f32.mrb[0].mxu0
        %223 = vdwg.mxu0
        %vm224 = vcmask 97280
        %225 = vst.msk [vmem:[%s161] sm:$0xff] %vm224, %v219
        %s226 = sand.u32 %s93, 1
        %s227 = scalar_lea.sflag [#allocation3], %s226
        %s228 = sand.u32 %s93, 1
        %s229 = smul.addr %s228, 8
        %s230 = scalar_lea.vmem [#allocation2], %s229
        // Predicated region
        $region33: #{tpu_custom_call.1} parent=31 // pred_check
          %p231 = pneg %p103
        $region34: #{tpu_custom_call.1} parent=31 // pred_check_branch
          %233 = sbr.rel (%p231) target = $region36
        $region35: #{tpu_custom_call.1} parent=31 // pred_region
          %s235 = ssub.s32 128, 128
          %236 = vsyncadd %s227, %s235
          %s237 = smul.addr %s17, 128
          %s238 = scalar_lea.hbm %s3, %s237
          %s240 = sshll.u32 %s230, 4
          %s241 = int_to_ptr.vmem [resolvable:$true] %s240
          %243 = dma.vmem_to_hbm [thread:$0]  %s241, 128, %s238, %s227
        $region36: #{tpu_custom_call.1} parent=31 // pred_fallthru
          _
      $region32: #{tpu_custom_call.1} parent=5 // pred_fallthru
        _
      %p244 = scmp.le.s32.totalorder 2, %s12
      // Predicated region
      $region37: #{tpu_custom_call.1} parent=5 // pred_check
        %p245 = pneg %p244
      $region38: #{tpu_custom_call.1} parent=5 // pred_check_branch
        %247 = sbr.rel (%p245) target = $region40
      $region39: #{tpu_custom_call.1} parent=5 // pred_region
        %s248 = ssub.s32 %s12, 2
        // Predicated region
        $region41: #{tpu_custom_call.1} parent=39 // pred_check
          %p249 = pneg %p109
        $region42: #{tpu_custom_call.1} parent=39 // pred_check_branch
          %251 = sbr.rel (%p249) target = $region44
        $region43: #{tpu_custom_call.1} parent=39 // pred_region
          %s252 = sand.u32 %s94, 1
          %s253 = scalar_lea.sflag [#allocation3], %s252
          %s254 = sand.u32 %s94, 1
          %s255 = smul.addr %s254, 8
          %s256 = scalar_lea.vmem [#allocation2], %s255
          %257 = dma.done %s253, 128
        $region44: #{tpu_custom_call.1} parent=39 // pred_fallthru
          _
      $region40: #{tpu_custom_call.1} parent=5 // pred_fallthru
        _
    $region6: #{tpu_custom_call.1} parent=1 // loop_footer
      %s16 = sadd.s32 1, %s12
    $region7: #{tpu_custom_call.1} parent=1 // loop_footer_branch
      %11 = sbr.rel target = $region3
    $region8: #{tpu_custom_call.1} parent=1 // loop_exit
      _
    %258 = vsyncpa [#allocation3], 1
    %s259 = scalar_lea.sflag [#allocation3], 1
    %260 = vsyncpa %s259, 1

</llo_original>
